<compile_context>
chip_gen: v6e
topology: v6e:2x2x1
jax: 0.10.0
libtpu: 0.0.40
codegen_flags: <defaults>
</compile_context>

<pallas_src>
import functools

import jax
import jax.numpy as jnp
from jax.experimental import pallas as pl
from jax.experimental.pallas import tpu as pltpu


def _conv1_kernel(x_ref, w_ref, o_ref, *, bn, W, r_tile, n_tiles):
    """Fused 3x3 / stride-1 / pad-1 conv as one packed-K matmul per row tile.

    x_ref: [bn, K1, Lw]    dw-packed, channel-padded input (Lw = (H+2)*W lanes)
    w_ref: [O,  3*K1]      packed weights, column = dh*K1 + dw*C + c
    o_ref: [bn, O, HWpad]  NCHW-layout output (lane = flattened h*W + w)
    """
    wl = w_ref[...]                                   # [64, 48], VMEM/vreg resident

    @pl.loop(0, bn)                                   # images in this grid step
    def _(b):
        for t in range(n_tiles):                      # static; small for cifar sizes
            r0 = t * r_tile
            # dh-packing: 3 sublane-aligned [K1, r_tile] slabs -> [3*K1, r_tile].
            rhs = jnp.concatenate(
                [x_ref[b, :, r0 + dh * W: r0 + dh * W + r_tile] for dh in range(3)],
                axis=0)
            # Single MXU contraction; [64, r_tile] f32 acc stays in registers.
            acc = jnp.dot(wl, rhs, preferred_element_type=jnp.float32)
            # Lane-dense store, already in NCHW order (no epilogue transpose).
            o_ref[b, :, r0:r0 + r_tile] = acc.astype(o_ref.dtype)


def _pick_r_tile(hw):
    for cand in (256, 128, 512, 384, 64, 32, 16, 8):
        if hw % cand == 0:
            return cand
    return hw  # TODO(synk): generic remainder handling for awkward H*W


@functools.partial(jax.jit, static_argnames=("bn", "compute_dtype", "out_dtype"))
def conv1_pallas(x_nchw, weight_oihw, *, bn=16, compute_dtype=jnp.bfloat16,
                 out_dtype=jnp.bfloat16):
    """Conv2d(3, 64, kernel_size=3, stride=1, padding=1, bias=False) via Pallas.

    x_nchw:      [N, C, H, W]   float32 (PyTorch NCHW convention)
    weight_oihw: [O, C, 3, 3]   float32 (PyTorch OIHW convention)
    returns:     [N, O, H, W]   out_dtype (bf16 by default, per writeback review)
    """
    N, C, H, W = x_nchw.shape
    O, Ci, KH, KW = weight_oihw.shape
    assert Ci == C and KH == 3 and KW == 3

    Hp = H + 2
    HW = H * W
    Lw = Hp * W                       # input rows per image, flattened into lanes
    K1 = 16                           # per-dh contraction: 3*C=9 -> 16 (aligned)
    HWpad = -(-HW // 128) * 128       # lane-dense output columns

    r_tile = _pick_r_tile(HW)
    n_tiles = HW // r_tile

    # images per grid step: >=2 grid steps for v7x's 2 TCs; stay inside VMEM.
    bn = max(1, min(bn, N // 2 if N >= 2 else 1))
    in_img = K1 * (-(-Lw // 128) * 128) * jnp.dtype(compute_dtype).itemsize
    out_img = O * HWpad * jnp.dtype(out_dtype).itemsize
    while bn > 1 and 2 * bn * (in_img + out_img) > (24 << 20):   # v7x-safe budget
        bn //= 2
    Npad = -(-N // bn) * bn

    # ---- input prep (cheap: ~3x the raw 3-channel input, << output bytes) ----
    xp = jnp.pad(x_nchw, ((0, 0), (0, 0), (1, 1), (1, 1)))            # [N,C,Hp,Wp]
    xw = jnp.concatenate([xp[:, :, :, dw:dw + W] for dw in range(3)], axis=1)
    xw = jnp.pad(xw, ((0, Npad - N), (0, K1 - 3 * C), (0, 0), (0, 0)))  # -> K1 chans
    xw = xw.reshape(Npad, K1, Lw).astype(compute_dtype)               # [Npad,K1,Lw]

    # ---- weight prep: [O,C,3,3] -> [O, 3*K1], column = dh*K1 + dw*C + c ----
    wl = jnp.transpose(weight_oihw, (0, 2, 3, 1)).reshape(O, KH, KW * C)
    wl = jnp.pad(wl, ((0, 0), (0, 0), (0, K1 - KW * C))).reshape(O, KH * K1)
    wl = wl.astype(compute_dtype)

    kernel = functools.partial(_conv1_kernel, bn=bn, W=W, r_tile=r_tile,
                               n_tiles=n_tiles)

    out = pl.pallas_call(
        kernel,
        out_shape=jax.ShapeDtypeStruct((Npad, O, HWpad), out_dtype),
        grid=(Npad // bn,),
        in_specs=[
            pl.BlockSpec((bn, K1, Lw), lambda i: (i, 0, 0)),
            # constant index_map -> packed weights stay VMEM-resident across steps
            pl.BlockSpec((O, KH * K1), lambda i: (0, 0)),
        ],
        out_specs=pl.BlockSpec((bn, O, HWpad), lambda i: (i, 0, 0)),
        compiler_params=pltpu.CompilerParams(dimension_semantics=("parallel",)),
    )(xw, wl)

    # ---- epilogue: pure metadata for aligned (cifar-style) shapes ----
    return out[:N, :, :HW].reshape(N, O, H, W)


class BaseMethodPallas:
    """Mirror of BaseMethod's backbone setup for cifar-style cfgs:
    conv1 = Conv2d(3, 64, k=3, s=1, p=1, bias=False)  (the Pallas hot path above),
    maxpool = Identity, fc = Identity (out_size = resnet18 fc.in_features = 512).
    BaseMethod.forward raises NotImplementedError in the reference module.
    """

    def __init__(self, key):
        # Deterministic synthetic init of the modified conv1 weight [64, 3, 3, 3].
        self.conv1_weight = 0.1 * jax.random.normal(key, (64, 3, 3, 3), jnp.float32)
        self.out_size = 512
        # TODO(synk): the remaining torchvision ResNet blocks and the eval_knn /
        # eval_sgd / get_data host-side utilities live outside this module's
        # source and are not reproduced here.

    def backbone_stem(self, x_nchw):
        return conv1_pallas(x_nchw, self.conv1_weight)


if __name__ == "__main__":
    key = jax.random.PRNGKey(0)
    k_x, k_w, k_x2 = jax.random.split(key, 3)

    method = BaseMethodPallas(k_w)
    w = method.conv1_weight
    conv_ref = functools.partial(
        jax.lax.conv_general_dilated, window_strides=(1, 1), padding="SAME",
        dimension_numbers=("NCHW", "OIHW", "NCHW"))

    # cifar-like stem input: batch=2, channels=3, spatial=16x16 (NCHW).
    x = jax.random.normal(k_x, (2, 3, 16, 16), jnp.float32)
    y = jax.block_until_ready(method.backbone_stem(x))
    assert y.shape == (2, 64, 16, 16)
    y32 = y.astype(jnp.float32)

    # Strict check of the kernel math: same bf16-rounded operands, f32 accumulate.
    y_bf16_ref = conv_ref(x.astype(jnp.bfloat16).astype(jnp.float32),
                          w.astype(jnp.bfloat16).astype(jnp.float32))
    assert jnp.allclose(y32, y_bf16_ref, rtol=2e-2, atol=2e-2), "kernel math mismatch"

    # Fidelity to the f32 module semantics (bf16 operands + store, f32 accumulate).
    y_f32_ref = conv_ref(x, w)
    assert jnp.allclose(y32, y_f32_ref, rtol=5e-2, atol=5e-2), "bf16 drift too large"

    # Second shape: exercises batch padding (5 -> 6 with bn=2), HW < 128 lane
    # padding of the output block, and sub-vreg (masked) tiles.
    x2 = jax.random.normal(k_x2, (5, 3, 8, 8), jnp.float32)
    y2 = jax.block_until_ready(conv1_pallas(x2, w, bn=2))
    assert y2.shape == (5, 64, 8, 8)
    assert jnp.allclose(y2.astype(jnp.float32), conv_ref(x2, w),
                        rtol=5e-2, atol=5e-2), "padded-shape path mismatch"

    print("KERNEL_OK")
</pallas_src>

<mosaic_0001>
module attributes {stable_mosaic.version = 11 : i64} {
  func.func @_conv1_kernel(%arg0: i32, %arg1: memref<1x16x288xbf16, #tpu.memory_space<vmem>>, %arg2: memref<64x48xbf16, #tpu.memory_space<vmem>>, %arg3: memref<1x64x256xbf16, #tpu.memory_space<vmem>>) attributes {dimension_semantics = [#tpu.dimension_semantics<parallel>], iteration_bounds = array<i64: 2>, scalar_prefetch = 0 : i64, scratch_operands = 0 : i64, tpu.core_type = #tpu.core_type<tc>, window_params = [{transform_indices = @transform_0, window_bounds = array<i64: 1, 16, 288>}, {pipeline_mode = #tpu.pipeline_mode<synchronous>, transform_indices = @transform_1, window_bounds = array<i64: 64, 48>}, {transform_indices = @transform_2, window_bounds = array<i64: 1, 64, 256>}]} {
    %c0 = arith.constant 0 : index
    %c0_0 = arith.constant 0 : index
    %0 = vector.load %arg2[%c0, %c0_0] : memref<64x48xbf16, #tpu.memory_space<vmem>>, vector<64x48xbf16>
    %c0_i32 = arith.constant 0 : i32
    %c1_i32 = arith.constant 1 : i32
    %1 = arith.muli %c0_i32, %c1_i32 : i32
    %c0_i32_1 = arith.constant 0 : i32
    %2 = arith.addi %c0_i32_1, %1 : i32
    %3 = arith.index_cast %2 : i32 to index
    %c0_2 = arith.constant 0 : index
    %c0_3 = arith.constant 0 : index
    %4 = vector.load %arg1[%3, %c0_2, %c0_3] : memref<1x16x288xbf16, #tpu.memory_space<vmem>>, vector<1x16x256xbf16>
    %5 = vector.shape_cast %4 : vector<1x16x256xbf16> to vector<16x256xbf16>
    %6 = arith.index_cast %2 : i32 to index
    %c0_4 = arith.constant 0 : index
    %c16 = arith.constant 16 : index
    %7 = vector.load %arg1[%6, %c0_4, %c16] : memref<1x16x288xbf16, #tpu.memory_space<vmem>>, vector<1x16x256xbf16>
    %8 = vector.shape_cast %7 : vector<1x16x256xbf16> to vector<16x256xbf16>
    %9 = arith.index_cast %2 : i32 to index
    %c0_5 = arith.constant 0 : index
    %c32 = arith.constant 32 : index
    %10 = vector.load %arg1[%9, %c0_5, %c32] : memref<1x16x288xbf16, #tpu.memory_space<vmem>>, vector<1x16x256xbf16>
    %11 = vector.shape_cast %10 : vector<1x16x256xbf16> to vector<16x256xbf16>
    %12 = tpu.concatenate %5, %8, %11 in 0 : vector<16x256xbf16>, vector<16x256xbf16>, vector<16x256xbf16> -> vector<48x256xbf16>
    %cst = arith.constant dense<0.000000e+00> : vector<64x256xf32>
    %13 = tpu.matmul %0, %12, %cst {dimension_numbers = #tpu.dot_dimension_numbers<[1], [0], [0], [1], [0, 0, 1, 1], [], []>} : vector<64x48xbf16>, vector<48x256xbf16>, vector<64x256xf32> -> vector<64x256xf32>
    %14 = arith.truncf %13 : vector<64x256xf32> to vector<64x256xbf16>
    %15 = arith.index_cast %2 : i32 to index
    %c0_6 = arith.constant 0 : index
    %c0_7 = arith.constant 0 : index
    %16 = vector.load %arg3[%15, %c0_6, %c0_7] : memref<1x64x256xbf16, #tpu.memory_space<vmem>>, vector<1x64x256xbf16>
    %17 = vector.shape_cast %16 : vector<1x64x256xbf16> to vector<64x256xbf16>
    %18 = vector.shape_cast %14 : vector<64x256xbf16> to vector<1x64x256xbf16>
    tpu.vector_store %arg3[%15, %c0_6, %c0_7], %18 {strides = array<i32>} : memref<1x64x256xbf16, #tpu.memory_space<vmem>>, vector<1x64x256xbf16>,
    %c1_i32_8 = arith.constant 1 : i32
    return
  }
  func.func @transform_0(%arg0: i32) -> (i32, i32, i32) {
    %c0_i32 = arith.constant 0 : i32
    %c0_i32_0 = arith.constant 0 : i32
    %c0_i32_1 = arith.constant 0 : i32
    return %arg0, %c0_i32, %c0_i32_0 : i32, i32, i32
  }
  func.func @transform_1(%arg0: i32) -> (i32, i32) {
    %c0_i32 = arith.constant 0 : i32
    %c0_i32_0 = arith.constant 0 : i32
    %c0_i32_1 = arith.constant 0 : i32
    return %c0_i32, %c0_i32_0 : i32, i32
  }
  func.func @transform_2(%arg0: i32) -> (i32, i32, i32) {
    %c0_i32 = arith.constant 0 : i32
    %c0_i32_0 = arith.constant 0 : i32
    %c0_i32_1 = arith.constant 0 : i32
    return %arg0, %c0_i32, %c0_i32_0 : i32, i32, i32
  }
}

</mosaic_0001>

<llo_original>
// kernel: conv1_pallas.1
$region0: #{conv1_pallas.1}
  #allocation0 [shape = 'u32[]', space=smem, size = 0x4, offset = 0x4, fixed_abs, tag = 'smem constant byte address 0x4 - core index']
  #allocation1 [shape = 'u32[144,128]{1,0:T(1,128)}', space=vmem, size = 0x12000, scoped, tag = 'internal scratch']
  %s0 = inlined_call_operand.vmem [shape: bf16[2,16,288], index: 0, kind: input, shape index: {}]
  %s1 = inlined_call_operand.vmem [shape: bf16[64,48], index: 1, kind: input, shape index: {}]
  %s2 = inlined_call_operand.vmem [shape: bf16[2,64,256], index: 2, kind: output, shape index: {}]
  %s3 = sld [smem:[#allocation0]]
  $region41: #{conv1_pallas.1} parent=0
    _
  %s5 = ssub.s32 1, %s3
  %s6 = scalar_select 0, %s5, %s3
  loop: start=0, step=1, limit=4
  $region2: #{conv1_pallas.1} parent=0 // loop_pre_header
    _
  $region3: #{conv1_pallas.1} parent=0 // loop_header
    %s8 = sphi 0, %s12
    %p9 = scmp.ge.s32.totalorder %s8, 4
    %s18 = sphi 0, %s20
    %s21 = sphi 0, %s18
    %s22 = sphi 0, %s21
    %s38 = sphi 0, %s22
    %s42 = sphi 0, %s42
    %s44 = sphi 0, %s42
    %s45 = sphi 0, %s44
    %s59 = sphi 0, %s45
    %s65 = sphi 0, %s67
    %s68 = sphi 0, %s65
    %s69 = sphi 0, %s68
    %s85 = sphi 0, %s69
  $region4: #{conv1_pallas.1} parent=0 // loop_header_branch
    %11 = sbr.rel (%p9) target = $region8
  $region5: #{conv1_pallas.1} parent=0 // loop_body
    %s13 = ssub.s32 %s8, 1
    %s14 = ssub.s32 %s8, 2
    %s15 = sadd.s32 %s8, 1
    %s16 = ssub.s32 %s8, %s15
    %p17 = scmp.eq.s32.totalorder %s16, 0
    %s19 = sadd.s32 %s18, 1
    %s20 = scalar_select %p17, %s18, %s19
    %p23 = pneg %p17
    %p24 = scmp.eq.s32.totalorder %s8, 1
    %p25 = por %p23, %p24
    %p26 = scmp.ne.s32.totalorder %s18, %s21
    %p27 = scmp.eq.s32.totalorder %s8, 0
    %p28 = por %p26, %p27
    %p29 = scmp.ne.s32.totalorder %s18, %s21
    %p30 = scmp.eq.s32.totalorder %s13, 1
    %p31 = por %p29, %p30
    %p32 = scmp.ne.s32.totalorder %s21, %s22
    %p33 = scmp.eq.s32.totalorder %s13, 0
    %p34 = por %p32, %p33
    %p35 = scmp.ne.s32.totalorder %s21, %s22
    %p36 = scmp.eq.s32.totalorder %s14, 1
    %p37 = por %p35, %p36
    %p39 = scmp.ne.s32.totalorder %s22, %s38
    %p40 = scmp.eq.s32.totalorder %s14, 0
    %p41 = por %p39, %p40
    %s43 = sadd.s32 %s42, 1
    %p46 = scmp.eq.s32.totalorder %s8, 1
    %p47 = scmp.ne.s32.totalorder %s42, %s44
    %p48 = scmp.eq.s32.totalorder %s8, 0
    %p49 = por %p47, %p48
    %p50 = scmp.ne.s32.totalorder %s42, %s44
    %p51 = scmp.eq.s32.totalorder %s13, 1
    %p52 = por %p50, %p51
    %p53 = scmp.ne.s32.totalorder %s44, %s45
    %p54 = scmp.eq.s32.totalorder %s13, 0
    %p55 = por %p53, %p54
    %p56 = scmp.ne.s32.totalorder %s44, %s45
    %p57 = scmp.eq.s32.totalorder %s14, 1
    %p58 = por %p56, %p57
    %p60 = scmp.ne.s32.totalorder %s45, %s59
    %p61 = scmp.eq.s32.totalorder %s14, 0
    %p62 = por %p60, %p61
    %s63 = ssub.s32 %s8, %s15
    %p64 = scmp.eq.s32.totalorder %s63, 0
    %s66 = sadd.s32 %s65, 1
    %s67 = scalar_select %p64, %s65, %s66
    %p70 = pneg %p64
    %p71 = scmp.eq.s32.totalorder %s8, 1
    %p72 = por %p70, %p71
    %p73 = scmp.ne.s32.totalorder %s65, %s68
    %p74 = scmp.eq.s32.totalorder %s8, 0
    %p75 = por %p73, %p74
    %p76 = scmp.ne.s32.totalorder %s65, %s68
    %p77 = scmp.eq.s32.totalorder %s13, 1
    %p78 = por %p76, %p77
    %p79 = scmp.ne.s32.totalorder %s68, %s69
    %p80 = scmp.eq.s32.totalorder %s13, 0
    %p81 = por %p79, %p80
    %p82 = scmp.ne.s32.totalorder %s68, %s69
    %p83 = scmp.eq.s32.totalorder %s14, 1
    %p84 = por %p82, %p83
    %p86 = scmp.ne.s32.totalorder %s69, %s85
    %p87 = scmp.eq.s32.totalorder %s14, 0
    %p88 = por %p86, %p87
    %p89 = scmp.le.s32.totalorder 1, %s8
    %p90 = scmp.lt.s32.totalorder %s8, 3
    %p91 = pnand %p89, %p90
    %p92 = pneg %p91
    // Predicated region
    $region9: #{conv1_pallas.1} parent=5 // pred_check
      _
    $region10: #{conv1_pallas.1} parent=5 // pred_check_branch
      %94 = sbr.rel (%p91) target = $region12
    $region11: #{conv1_pallas.1} parent=5 // pred_region
      %s95 = ssub.s32 %s8, 1
      // Predicated region
      $region13: #{conv1_pallas.1} parent=11 // pred_check
        %p96 = pneg %p55
      $region14: #{conv1_pallas.1} parent=11 // pred_check_branch
        %98 = sbr.rel (%p96) target = $region16
      $region15: #{conv1_pallas.1} parent=11 // pred_region
        _
      $region16: #{conv1_pallas.1} parent=11 // pred_fallthru
        _
    $region12: #{conv1_pallas.1} parent=5 // pred_fallthru
      _
    %p99 = scmp.lt.s32.totalorder %s8, 2
    // Predicated region
    $region17: #{conv1_pallas.1} parent=5 // pred_check
      %p100 = pneg %p99
    $region18: #{conv1_pallas.1} parent=5 // pred_check_branch
      %102 = sbr.rel (%p100) target = $region20
    $region19: #{conv1_pallas.1} parent=5 // pred_region
      // Predicated region
      $region21: #{conv1_pallas.1} parent=19 // pred_check
        %p103 = pneg %p28
      $region22: #{conv1_pallas.1} parent=19 // pred_check_branch
        %105 = sbr.rel (%p103) target = $region24
      $region23: #{conv1_pallas.1} parent=19 // pred_region
        %p106 = scmp.lt.s32.totalorder %s8, 1
        %s107 = scalar_select %p106, %s8, 1
        %s108 = smul.addr %s107, 6
        %s109 = smul.addr %s108, 4
        %s110 = scalar_lea.vmem %s0, %s109
      $region24: #{conv1_pallas.1} parent=19 // pred_fallthru
        _
    $region20: #{conv1_pallas.1} parent=5 // pred_fallthru
      _
    %p111 = scmp.le.s32.totalorder 1, %s8
    %p112 = scmp.lt.s32.totalorder %s8, 3
    %p113 = pnand %p111, %p112
    %p114 = pneg %p113
    // Predicated region
    $region25: #{conv1_pallas.1} parent=5 // pred_check
      _
    $region26: #{conv1_pallas.1} parent=5 // pred_check_branch
      %116 = sbr.rel (%p113) target = $region28
    $region27: #{conv1_pallas.1} parent=5 // pred_region
      %s117 = ssub.s32 %s8, 1
      %p118 = scmp.lt.s32.totalorder %s13, 1
      %s119 = scalar_select %p118, %s13, 1
      %s120 = smul.addr %s119, 6
      %s121 = smul.addr %s120, 4
      %s122 = scalar_lea.vmem %s0, %s121
      %p123 = pneg %p34
      %p124 = pneg %p31
      %p125 = pneg %p55
      %p126 = pneg %p52
      %p127 = pneg %p81
      %p128 = pneg %p78
      %p129 = scmp.lt.s32.totalorder %s13, 1
      %s130 = scalar_select %p129, %s13, 1
      %s131 = smul.addr %s130, 16
      %s132 = smul.addr %s131, 4
      %s133 = scalar_lea.vmem %s2, %s132
      %p134 = scmp.lt.s32.totalorder %s13, 1
      %s135 = scalar_select %p134, %s13, 1
      %s136 = smul.addr %s135, 6
      %s137 = smul.addr %s136, 4
      %s138 = scalar_lea.vmem %s0, %s137
      %p139 = scmp.lt.s32.totalorder %s13, 1
      %s140 = scalar_select %p139, %s13, 1
      %s141 = smul.addr %s140, 16
      %s142 = smul.addr %s141, 4
      %s143 = scalar_lea.vmem %s2, %s142
      %v145 = vld [vmem:[%s1] sm:$0xf]
      %v146 = vld [vmem:[%s1 + $0x4] sm:$0xf]
      %v147 = vld [vmem:[%s1 + $0x8] sm:$0xf]
      %v148 = vld [vmem:[%s1 + $0xc] sm:$0xf]
      %v149 = vld [vmem:[%s1 + $0x10] sm:$0xf]
      %v150 = vld [vmem:[%s1 + $0x14] sm:$0xf]
      %v151 = vld [vmem:[%s1 + $0x18] sm:$0xf]
      %v152 = vld [vmem:[%s1 + $0x1c] sm:$0xf]
      %v153 = vld [vmem:[%s138] sm:$0xff]
      %v154 = vld [vmem:[%s138 + $0xc] sm:$0xff]
      %v155 = vld [vmem:[%s138 + $0x8] sm:$0xf]
      %v156 = vld [vmem:[%s138 + $0x14] sm:$0xf]
      %v159 = vunpack.c.l.b16 %v153
      %v160 = vunpack.c.h.b16 %v153
      %v161 = vunpack.c.l.b16 %v154
      %v162 = vunpack.c.h.b16 %v154
      %v163 = vpack.c.b16 %v161, %v159
      %v164 = vpack.c.b16 %v162, %v160
      %v169 = vunpack.c.l.b16 %v155
      %v170 = vunpack.c.l.b16 %v156
      %v171 = vpack.c.b16 %v170, %v169
      %172 = vrot.lane.b32.xlu0 %v163, 112
      %v173 = vpop.permute.xlu0 %172
      %174 = vrot.lane.b32.xlu0 %v164, 112
      %v175 = vpop.permute.xlu0 %174
      %176 = vrot.lane.b32.xlu0 %v171, 112
      %v177 = vpop.permute.xlu0 %176
      %vm178 = vcmask 916480
      %v179 = vsel %vm178, %v173, %v175
      %v180 = vsel %vm178, %v175, %v177
      %183 = vrot.lane.b32.xlu0 %v163, 96
      %v184 = vpop.permute.xlu0 %183
      %185 = vrot.lane.b32.xlu0 %v164, 96
      %v186 = vpop.permute.xlu0 %185
      %187 = vrot.lane.b32.xlu0 %v171, 96
      %v188 = vpop.permute.xlu0 %187
      %vm189 = vcmask 785408
      %v190 = vsel %vm189, %v184, %v186
      %v191 = vsel %vm189, %v186, %v188
      %v202 = vunpack.c.l.b16 %v145
      %v203 = vunpack.c.l.b16 %v146
      %v204 = vunpack.c.l.b16 %v147
      %v205 = vunpack.c.l.b16 %v148
      %v206 = vunpack.c.l.b16 %v149
      %v207 = vunpack.c.l.b16 %v150
      %v208 = vunpack.c.l.b16 %v151
      %v209 = vunpack.c.l.b16 %v152
      %v210 = vpack.c.b16 %v203, %v202
      %v211 = vpack.c.b16 %v205, %v204
      %v212 = vpack.c.b16 %v207, %v206
      %v213 = vpack.c.b16 %v209, %v208
      %vm214 = vcmask 392192
      %v216 = vsel %vm214, %v210, 0
      %v219 = vsel %vm214, %v211, 0
      %v222 = vsel %vm214, %v212, 0
      %v225 = vsel %vm214, %v213, 0
      %227 = vmatprep.subr.bf16.mxu0 0
      %228 = vmatpush1.bf16.msra.mxu0 0
      %229 = vmatprep.subr.bf16.mxu0 0
      %230 = vmatpush1.bf16.msra.mxu0 0
      %231 = vmatprep.subr.bf16.mxu0 0
      %232 = vmatpush1.bf16.msra.mxu0 0
      %233 = vmatprep.subr.bf16.mxu0 0
      %234 = vmatpush1.bf16.msra.mxu0 0
      %235 = vmatprep.subr.bf16.mxu0 0
      %236 = vmatpush1.bf16.msra.mxu0 0
      %237 = vmatprep.subr.bf16.mxu0 %v191
      %238 = vmatpush1.bf16.msra.mxu0 %v190
      %239 = vmatprep.subr.bf16.mxu0 %v180
      %240 = vmatpush1.bf16.msra.mxu0 %v179
      %241 = vmatprep.subr.bf16.mxu0 %v164
      %242 = vmatpush1.bf16.msra.mxu0 %v163
      %243 = vmatprep.subr.bf16.mxu0 0
      %244 = vmatpush2.bf16.msra.mxu0 0
      %245 = vmatprep.subr.bf16.mxu0 0
      %246 = vmatpush2.bf16.msra.mxu0 0
      %247 = vmatprep.subr.bf16.mxu0 0
      %248 = vmatpush2.bf16.msra.mxu0 0
      %249 = vmatprep.subr.bf16.mxu0 0
      %250 = vmatpush2.bf16.msra.mxu0 0
      %251 = vmatprep.subr.bf16.mxu0 0
      %252 = vmatpush2.bf16.msra.mxu0 0
      %253 = vmatprep.subr.bf16.mxu0 0
      %254 = vmatpush2.bf16.msra.mxu0 0
      %255 = vmatprep.subr.bf16.mxu0 0
      %256 = vmatpush2.bf16.msra.mxu0 0
      %257 = vmatprep.subr.bf16.mxu0 0
      %258 = vmatpush2.bf16.msra.mxu0 0
      %259 = vmatprep.mubr.bf16.mxu0 0
      %260 = vmatmul.mubr.bf16.gmra.mxu0 %v216
      %v261 = vpop.f32.mrf.mxu0
      %v262 = vadd.f32 0.0, %v261
      %v263 = vpop.f32.mrf.mxu0
      %v264 = vadd.f32 0.0, %v263
      %v265 = vpop.f32.mrf.mxu0
      %v266 = vadd.f32 0.0, %v265
      %v267 = vpop.f32.mrf.mxu0
      %v268 = vadd.f32 0.0, %v267
      %269 = vmatprep.mubr.bf16.mxu0 0
      %270 = vmatmul.mubr.bf16.gmra.mxu0 %v219
      %v271 = vpop.f32.mrf.mxu0
      %v272 = vadd.f32 0.0, %v271
      %v273 = vpop.f32.mrf.mxu0
      %v274 = vadd.f32 0.0, %v273
      %v275 = vpop.f32.mrf.mxu0
      %v276 = vadd.f32 0.0, %v275
      %v277 = vpop.f32.mrf.mxu0
      %v278 = vadd.f32 0.0, %v277
      %279 = vmatprep.mubr.bf16.mxu0 0
      %280 = vmatmul.mubr.bf16.gmra.mxu0 %v222
      %v281 = vpop.f32.mrf.mxu0
      %v282 = vadd.f32 0.0, %v281
      %v283 = vpop.f32.mrf.mxu0
      %v284 = vadd.f32 0.0, %v283
      %v285 = vpop.f32.mrf.mxu0
      %v286 = vadd.f32 0.0, %v285
      %v287 = vpop.f32.mrf.mxu0
      %v288 = vadd.f32 0.0, %v287
      %289 = vmatprep.mubr.bf16.mxu0 0
      %290 = vmatmul.mubr.bf16.gmra.mxu0 %v225
      %v291 = vpop.f32.mrf.mxu0
      %v292 = vadd.f32 0.0, %v291
      %v293 = vpop.f32.mrf.mxu0
      %v294 = vadd.f32 0.0, %v293
      %v295 = vpop.f32.mrf.mxu0
      %v296 = vadd.f32 0.0, %v295
      %v297 = vpop.f32.mrf.mxu0
      %v298 = vadd.f32 0.0, %v297
      %299 = vdwg.mxu0
      %v300 = vpack.c.bf16 %v266, %v262
      %v301 = vpack.c.bf16 %v268, %v264
      %v302 = vpack.c.bf16 %v276, %v272
      %v303 = vpack.c.bf16 %v278, %v274
      %v304 = vpack.c.bf16 %v286, %v282
      %v305 = vpack.c.bf16 %v288, %v284
      %v306 = vpack.c.bf16 %v296, %v292
      %v307 = vpack.c.bf16 %v298, %v294
      %v316 = vunpack.c.l.b16 %v300
      %v317 = vunpack.c.l.b16 %v301
      %v318 = vunpack.c.h.b16 %v300
      %v319 = vunpack.c.h.b16 %v301
      %v320 = vunpack.c.l.b16 %v302
      %v321 = vunpack.c.l.b16 %v303
      %v322 = vunpack.c.h.b16 %v302
      %v323 = vunpack.c.h.b16 %v303
      %v324 = vunpack.c.l.b16 %v304
      %v325 = vunpack.c.l.b16 %v305
      %v326 = vunpack.c.h.b16 %v304
      %v327 = vunpack.c.h.b16 %v305
      %v328 = vunpack.c.l.b16 %v306
      %v329 = vunpack.c.l.b16 %v307
      %v330 = vunpack.c.h.b16 %v306
      %v331 = vunpack.c.h.b16 %v307
      %v332 = vpack.c.b16 %v317, %v316
      %v333 = vpack.c.b16 %v319, %v318
      %v334 = vpack.c.b16 %v321, %v320
      %v335 = vpack.c.b16 %v323, %v322
      %v336 = vpack.c.b16 %v325, %v324
      %v337 = vpack.c.b16 %v327, %v326
      %v338 = vpack.c.b16 %v329, %v328
      %v339 = vpack.c.b16 %v331, %v330
      %348 = vst [vmem:[%s143] sm:$0xff] %v332
      %349 = vst [vmem:[%s143 + $0x8] sm:$0xff] %v333
      %350 = vst [vmem:[%s143 + $0x10] sm:$0xff] %v334
      %351 = vst [vmem:[%s143 + $0x18] sm:$0xff] %v335
      %352 = vst [vmem:[%s143 + $0x20] sm:$0xff] %v336
      %353 = vst [vmem:[%s143 + $0x28] sm:$0xff] %v337
      %354 = vst [vmem:[%s143 + $0x30] sm:$0xff] %v338
      %355 = vst [vmem:[%s143 + $0x38] sm:$0xff] %v339
      %p356 = scmp.lt.s32.totalorder %s13, 1
      %s357 = scalar_select %p356, %s13, 1
      %s358 = smul.addr %s357, 16
      %s359 = smul.addr %s358, 4
      %s360 = scalar_lea.vmem %s2, %s359
      // Predicated region
      $region29: #{conv1_pallas.1} parent=27 // pred_check
        %p361 = pneg %p78
      $region30: #{conv1_pallas.1} parent=27 // pred_check_branch
        %363 = sbr.rel (%p361) target = $region32
      $region31: #{conv1_pallas.1} parent=27 // pred_region
        _
      $region32: #{conv1_pallas.1} parent=27 // pred_fallthru
        _
    $region28: #{conv1_pallas.1} parent=5 // pred_fallthru
      _
    %p364 = scmp.le.s32.totalorder 2, %s8
    // Predicated region
    $region33: #{conv1_pallas.1} parent=5 // pred_check
      %p365 = pneg %p364
    $region34: #{conv1_pallas.1} parent=5 // pred_check_branch
      %367 = sbr.rel (%p365) target = $region36
    $region35: #{conv1_pallas.1} parent=5 // pred_region
      %s368 = ssub.s32 %s8, 2
      // Predicated region
      $region37: #{conv1_pallas.1} parent=35 // pred_check
        %p369 = pneg %p84
      $region38: #{conv1_pallas.1} parent=35 // pred_check_branch
        %371 = sbr.rel (%p369) target = $region40
      $region39: #{conv1_pallas.1} parent=35 // pred_region
        %p372 = scmp.lt.s32.totalorder %s14, 1
        %s373 = scalar_select %p372, %s14, 1
        %s374 = smul.addr %s373, 16
        %s375 = smul.addr %s374, 4
        %s376 = scalar_lea.vmem %s2, %s375
      $region40: #{conv1_pallas.1} parent=35 // pred_fallthru
        _
    $region36: #{conv1_pallas.1} parent=5 // pred_fallthru
      _
  $region6: #{conv1_pallas.1} parent=0 // loop_footer
    %s12 = sadd.s32 1, %s8
  $region7: #{conv1_pallas.1} parent=0 // loop_footer_branch
    %7 = sbr.rel target = $region3
  $region8: #{conv1_pallas.1} parent=0 // loop_exit
    _

</llo_original>
